<compile_context>
chip_gen: v7x
topology: tpu7x:2x2x1
jax: 0.10.0
libtpu: 0.0.40
codegen_flags: <defaults>
</compile_context>

<pallas_src>
import jax
import jax.numpy as jnp
from jax.experimental import pallas as pl
from jax.experimental.pallas import tpu as pltpu


def _round_up(a: int, m: int) -> int:
    return ((a + m - 1) // m) * m


def _vmem_limit_bytes() -> int:
    """Half of physical VMEM, capped at 64 MiB (v5e/v6e -> 64 MiB, v7x -> 32 MiB)."""
    try:
        cap = pltpu.get_tpu_info().vmem_capacity_bytes
    except Exception:
        cap = 64 * 1024 * 1024  # conservative fallback
    return int(min(cap // 2, 64 * 1024 * 1024))


# ----------------------------------------------------------------------------
# Small-graph path: original layouts, VPU contraction over V.
# ----------------------------------------------------------------------------

def _dynconv_vpu_kernel(x_ref, a_ref, o_ref):
    # x_ref: (1, C, V, TL)   a_ref: (1, V, W, TL)   o_ref: (1, C, W, TL)
    C, V = x_ref.shape[1], x_ref.shape[2]
    W, TL = a_ref.shape[2], a_ref.shape[3]
    acc = jnp.zeros((C, W, TL), jnp.float32)
    # V is small and static on this path -> fully unrolled loop with static
    # (zero-cost) ref slices; accumulate in f32 on the VPU.
    for v in range(V):
        xv = x_ref[0, :, v:v + 1, :].astype(jnp.float32)   # (C, 1, TL)
        av = a_ref[0, v:v + 1, :, :].astype(jnp.float32)   # (1, W, TL)
        acc = acc + xv * av                                 # (C, W, TL)
    o_ref[0] = acc.astype(o_ref.dtype)


def _dynconv_small(x, adj, *, out_dtype, vmem_block_budget=8 * 1024 * 1024):
    N, C, V, L = x.shape
    W = adj.shape[2]
    xb = x.dtype.itemsize
    ab = adj.dtype.itemsize
    ob = jnp.dtype(out_dtype).itemsize

    # Bytes per lane position in one grid step: double-buffered inputs and
    # output plus the (single-buffered) f32 accumulator.
    per_l = 2 * (C * V * xb + V * W * ab + C * W * ob) + C * W * 4
    if L * per_l <= vmem_block_budget:
        TL = L                                # full L block (always legal)
    else:
        TL = min(L, max(128, ((vmem_block_budget // per_l) // 128) * 128))
    grid_l = pl.cdiv(L, TL)

    cost = pl.CostEstimate(
        flops=2 * N * C * V * W * L,
        transcendentals=0,
        bytes_accessed=N * L * (C * V * xb + V * W * ab + C * W * ob),
    )

    return pl.pallas_call(
        _dynconv_vpu_kernel,
        out_shape=jax.ShapeDtypeStruct((N, C, W, L), out_dtype),
        grid=(N, grid_l),
        in_specs=[
            pl.BlockSpec((1, C, V, TL), lambda n, lt: (n, 0, 0, lt)),
            pl.BlockSpec((1, V, W, TL), lambda n, lt: (n, 0, 0, lt)),
        ],
        out_specs=pl.BlockSpec((1, C, W, TL), lambda n, lt: (n, 0, 0, lt)),
        compiler_params=pltpu.CompilerParams(
            dimension_semantics=("parallel", "parallel")),
        cost_estimate=cost,
    )(x, adj)


# ----------------------------------------------------------------------------
# Large-graph path (V, W > 128): batched MXU matmul over (n, l) pairs.
# ----------------------------------------------------------------------------

def _dynconv_mxu_kernel(x_ref, a_ref, o_ref):
    # x_ref: (TB, Cp, Vp)  a_ref: (TB, Vp, Wp)  o_ref: (TB, Cp, Wp)
    o_ref[...] = jnp.einsum(
        "bcv,bvw->bcw",
        x_ref[...],
        a_ref[...],
        preferred_element_type=jnp.float32,
    ).astype(o_ref.dtype)


def _dynconv_mxu(x, adj, *, out_dtype):
    N, C, V, L = x.shape
    W = adj.shape[2]
    B = N * L

    in_bytes = max(x.dtype.itemsize, adj.dtype.itemsize)
    out_bytes = jnp.dtype(out_dtype).itemsize

    sub = 16 if in_bytes == 2 else 8
    Cp = _round_up(C, sub)
    Vp = _round_up(V, 128)
    Wp = _round_up(W, 128)

    vmem_limit = _vmem_limit_bytes()
    block_budget = max(2 * 1024 * 1024, (vmem_limit * 2) // 5)  # headroom

    # Per-step VMEM: double-buffered inputs + output, plus the f32 einsum
    # intermediate that exists before the down-cast (single-buffered).
    per_b = (2 * ((Cp * Vp + Vp * Wp) * in_bytes + Cp * Wp * out_bytes)
             + Cp * Wp * 4)
    tb = max(1, min(block_budget // per_b, B))
    grid = max(1, pl.cdiv(B, tb))
    if grid > 1 and grid % 2:
        grid += 1                # even step count -> both v7x TCs get equal work
    tb = pl.cdiv(B, grid)
    Bp = grid * tb

    # (N,C,V,L) -> (B,C,V), (N,V,W,L) -> (B,V,W); pad to tile-aligned shapes.
    # TODO(synk): pad V/W only inside VMEM (scratch memset + partial-tile DMA)
    # to avoid the <=~1.5x HBM inflation for V,W just above a multiple of 128.
    xm = jnp.transpose(x, (0, 3, 1, 2)).reshape(B, C, V)
    am = jnp.transpose(adj, (0, 3, 1, 2)).reshape(B, V, W)
    xm = jnp.pad(xm, ((0, Bp - B), (0, Cp - C), (0, Vp - V)))
    am = jnp.pad(am, ((0, Bp - B), (0, Vp - V), (0, Wp - W)))

    cost = pl.CostEstimate(
        flops=2 * Bp * Cp * Vp * Wp,
        transcendentals=0,
        bytes_accessed=Bp * ((Cp * Vp + Vp * Wp) * in_bytes
                             + Cp * Wp * out_bytes),
    )

    out_p = pl.pallas_call(
        _dynconv_mxu_kernel,
        out_shape=jax.ShapeDtypeStruct((Bp, Cp, Wp), out_dtype),
        grid=(grid,),
        in_specs=[
            pl.BlockSpec((tb, Cp, Vp), lambda b: (b, 0, 0)),
            pl.BlockSpec((tb, Vp, Wp), lambda b: (b, 0, 0)),
        ],
        out_specs=pl.BlockSpec((tb, Cp, Wp), lambda b: (b, 0, 0)),
        compiler_params=pltpu.CompilerParams(
            dimension_semantics=("parallel",),
            vmem_limit_bytes=vmem_limit),
        cost_estimate=cost,
    )(xm, am)

    out = out_p[:B, :C, :W].reshape(N, L, C, W)
    return jnp.transpose(out, (0, 2, 3, 1))


# ----------------------------------------------------------------------------
# Public entry point.
# ----------------------------------------------------------------------------

def dynconv(x, adj, *, compute_dtype=None, small_graph_max=128):
    """Pallas implementation of DyNconv.forward.

    x:   (N, C, V, L)
    adj: (N, V, W, L)
    returns (N, C, W, L).

    compute_dtype: optional down-cast of the inputs (e.g. jnp.bfloat16) to
    halve HBM traffic; changes numerics relative to the f32 reference, so it
    is opt-in.
    """
    N, C, V, L = x.shape
    n2, v2, W, l2 = adj.shape
    assert (n2, v2, l2) == (N, V, L), "shape mismatch between x and adj"

    out_dtype = jnp.result_type(x.dtype, adj.dtype)
    if compute_dtype is not None:
        x = x.astype(compute_dtype)
        adj = adj.astype(compute_dtype)

    if max(V, W) <= small_graph_max:
        return _dynconv_small(x, adj, out_dtype=out_dtype)
    return _dynconv_mxu(x, adj, out_dtype=out_dtype)


if __name__ == "__main__":
    key = jax.random.PRNGKey(0)
    kx, ka = jax.random.split(key)

    # small shapes consistent with the module's forward:
    # batch=2, channels=4, nodes V=W=16, seq len L=8
    N, C, V, W, L = 2, 4, 16, 16, 8
    x = jax.random.normal(kx, (N, C, V, L), dtype=jnp.float32)
    adj = jax.random.normal(ka, (N, V, W, L), dtype=jnp.float32)

    out = jax.block_until_ready(dynconv(x, adj))

    # Full-precision reference (kernel does exact f32 math on this path).
    ref = jnp.einsum("ncvl,nvwl->ncwl", x, adj,
                     precision=jax.lax.Precision.HIGHEST)

    assert out.shape == (N, C, W, L)
    assert out.dtype == ref.dtype
    assert jnp.allclose(out, ref, atol=1e-4, rtol=1e-4), (
        float(jnp.max(jnp.abs(out - ref))))

    print("KERNEL_OK")
</pallas_src>

<mosaic_0001>
module attributes {stable_mosaic.version = 11 : i64} {
  func.func @_dynconv_vpu_kernel(%arg0: i32, %arg1: i32, %arg2: memref<1x4x16x8xf32, #tpu.memory_space<vmem>>, %arg3: memref<1x16x16x8xf32, #tpu.memory_space<vmem>>, %arg4: memref<1x4x16x8xf32, #tpu.memory_space<vmem>>) attributes {dimension_semantics = [#tpu.dimension_semantics<parallel>, #tpu.dimension_semantics<parallel>], iteration_bounds = array<i64: 2, 1>, scalar_prefetch = 0 : i64, scratch_operands = 0 : i64, tpu.core_type = #tpu.core_type<tc>, window_params = [{transform_indices = @transform_0, window_bounds = array<i64: 1, 4, 16, 8>}, {transform_indices = @transform_1, window_bounds = array<i64: 1, 16, 16, 8>}, {transform_indices = @transform_2, window_bounds = array<i64: 1, 4, 16, 8>}]} {
    %cst = arith.constant 0.000000e+00 : f32
    %0 = vector.broadcast %cst : f32 to vector<4x16x8xf32>
    %c0 = arith.constant 0 : index
    %c0_0 = arith.constant 0 : index
    %c0_1 = arith.constant 0 : index
    %c0_2 = arith.constant 0 : index
    %1 = vector.load %arg2[%c0, %c0_0, %c0_1, %c0_2] : memref<1x4x16x8xf32, #tpu.memory_space<vmem>>, vector<1x4x1x8xf32>
    %2 = vector.shape_cast %1 : vector<1x4x1x8xf32> to vector<4x1x8xf32>
    %c0_3 = arith.constant 0 : index
    %c0_4 = arith.constant 0 : index
    %c0_5 = arith.constant 0 : index
    %c0_6 = arith.constant 0 : index
    %3 = vector.load %arg3[%c0_3, %c0_4, %c0_5, %c0_6] : memref<1x16x16x8xf32, #tpu.memory_space<vmem>>, vector<1x1x16x8xf32>
    %4 = vector.shape_cast %3 : vector<1x1x16x8xf32> to vector<1x16x8xf32>
    %5 = vector.broadcast %2 : vector<4x1x8xf32> to vector<4x16x8xf32>
    %6 = vector.broadcast %4 : vector<1x16x8xf32> to vector<4x16x8xf32>
    %7 = arith.mulf %5, %6 : vector<4x16x8xf32>
    %8 = arith.addf %0, %7 : vector<4x16x8xf32>
    %c0_7 = arith.constant 0 : index
    %c0_8 = arith.constant 0 : index
    %c1 = arith.constant 1 : index
    %c0_9 = arith.constant 0 : index
    %9 = vector.load %arg2[%c0_7, %c0_8, %c1, %c0_9] : memref<1x4x16x8xf32, #tpu.memory_space<vmem>>, vector<1x4x1x8xf32>
    %10 = vector.shape_cast %9 : vector<1x4x1x8xf32> to vector<4x1x8xf32>
    %c0_10 = arith.constant 0 : index
    %c1_11 = arith.constant 1 : index
    %c0_12 = arith.constant 0 : index
    %c0_13 = arith.constant 0 : index
    %11 = vector.load %arg3[%c0_10, %c1_11, %c0_12, %c0_13] : memref<1x16x16x8xf32, #tpu.memory_space<vmem>>, vector<1x1x16x8xf32>
    %12 = vector.shape_cast %11 : vector<1x1x16x8xf32> to vector<1x16x8xf32>
    %13 = vector.broadcast %10 : vector<4x1x8xf32> to vector<4x16x8xf32>
    %14 = vector.broadcast %12 : vector<1x16x8xf32> to vector<4x16x8xf32>
    %15 = arith.mulf %13, %14 : vector<4x16x8xf32>
    %16 = arith.addf %8, %15 : vector<4x16x8xf32>
    %c0_14 = arith.constant 0 : index
    %c0_15 = arith.constant 0 : index
    %c2 = arith.constant 2 : index
    %c0_16 = arith.constant 0 : index
    %17 = vector.load %arg2[%c0_14, %c0_15, %c2, %c0_16] : memref<1x4x16x8xf32, #tpu.memory_space<vmem>>, vector<1x4x1x8xf32>
    %18 = vector.shape_cast %17 : vector<1x4x1x8xf32> to vector<4x1x8xf32>
    %c0_17 = arith.constant 0 : index
    %c2_18 = arith.constant 2 : index
    %c0_19 = arith.constant 0 : index
    %c0_20 = arith.constant 0 : index
    %19 = vector.load %arg3[%c0_17, %c2_18, %c0_19, %c0_20] : memref<1x16x16x8xf32, #tpu.memory_space<vmem>>, vector<1x1x16x8xf32>
    %20 = vector.shape_cast %19 : vector<1x1x16x8xf32> to vector<1x16x8xf32>
    %21 = vector.broadcast %18 : vector<4x1x8xf32> to vector<4x16x8xf32>
    %22 = vector.broadcast %20 : vector<1x16x8xf32> to vector<4x16x8xf32>
    %23 = arith.mulf %21, %22 : vector<4x16x8xf32>
    %24 = arith.addf %16, %23 : vector<4x16x8xf32>
    %c0_21 = arith.constant 0 : index
    %c0_22 = arith.constant 0 : index
    %c3 = arith.constant 3 : index
    %c0_23 = arith.constant 0 : index
    %25 = vector.load %arg2[%c0_21, %c0_22, %c3, %c0_23] : memref<1x4x16x8xf32, #tpu.memory_space<vmem>>, vector<1x4x1x8xf32>
    %26 = vector.shape_cast %25 : vector<1x4x1x8xf32> to vector<4x1x8xf32>
    %c0_24 = arith.constant 0 : index
    %c3_25 = arith.constant 3 : index
    %c0_26 = arith.constant 0 : index
    %c0_27 = arith.constant 0 : index
    %27 = vector.load %arg3[%c0_24, %c3_25, %c0_26, %c0_27] : memref<1x16x16x8xf32, #tpu.memory_space<vmem>>, vector<1x1x16x8xf32>
    %28 = vector.shape_cast %27 : vector<1x1x16x8xf32> to vector<1x16x8xf32>
    %29 = vector.broadcast %26 : vector<4x1x8xf32> to vector<4x16x8xf32>
    %30 = vector.broadcast %28 : vector<1x16x8xf32> to vector<4x16x8xf32>
    %31 = arith.mulf %29, %30 : vector<4x16x8xf32>
    %32 = arith.addf %24, %31 : vector<4x16x8xf32>
    %c0_28 = arith.constant 0 : index
    %c0_29 = arith.constant 0 : index
    %c4 = arith.constant 4 : index
    %c0_30 = arith.constant 0 : index
    %33 = vector.load %arg2[%c0_28, %c0_29, %c4, %c0_30] : memref<1x4x16x8xf32, #tpu.memory_space<vmem>>, vector<1x4x1x8xf32>
    %34 = vector.shape_cast %33 : vector<1x4x1x8xf32> to vector<4x1x8xf32>
    %c0_31 = arith.constant 0 : index
    %c4_32 = arith.constant 4 : index
    %c0_33 = arith.constant 0 : index
    %c0_34 = arith.constant 0 : index
    %35 = vector.load %arg3[%c0_31, %c4_32, %c0_33, %c0_34] : memref<1x16x16x8xf32, #tpu.memory_space<vmem>>, vector<1x1x16x8xf32>
    %36 = vector.shape_cast %35 : vector<1x1x16x8xf32> to vector<1x16x8xf32>
    %37 = vector.broadcast %34 : vector<4x1x8xf32> to vector<4x16x8xf32>
    %38 = vector.broadcast %36 : vector<1x16x8xf32> to vector<4x16x8xf32>
    %39 = arith.mulf %37, %38 : vector<4x16x8xf32>
    %40 = arith.addf %32, %39 : vector<4x16x8xf32>
    %c0_35 = arith.constant 0 : index
    %c0_36 = arith.constant 0 : index
    %c5 = arith.constant 5 : index
    %c0_37 = arith.constant 0 : index
    %41 = vector.load %arg2[%c0_35, %c0_36, %c5, %c0_37] : memref<1x4x16x8xf32, #tpu.memory_space<vmem>>, vector<1x4x1x8xf32>
    %42 = vector.shape_cast %41 : vector<1x4x1x8xf32> to vector<4x1x8xf32>
    %c0_38 = arith.constant 0 : index
    %c5_39 = arith.constant 5 : index
    %c0_40 = arith.constant 0 : index
    %c0_41 = arith.constant 0 : index
    %43 = vector.load %arg3[%c0_38, %c5_39, %c0_40, %c0_41] : memref<1x16x16x8xf32, #tpu.memory_space<vmem>>, vector<1x1x16x8xf32>
    %44 = vector.shape_cast %43 : vector<1x1x16x8xf32> to vector<1x16x8xf32>
    %45 = vector.broadcast %42 : vector<4x1x8xf32> to vector<4x16x8xf32>
    %46 = vector.broadcast %44 : vector<1x16x8xf32> to vector<4x16x8xf32>
    %47 = arith.mulf %45, %46 : vector<4x16x8xf32>
    %48 = arith.addf %40, %47 : vector<4x16x8xf32>
    %c0_42 = arith.constant 0 : index
    %c0_43 = arith.constant 0 : index
    %c6 = arith.constant 6 : index
    %c0_44 = arith.constant 0 : index
    %49 = vector.load %arg2[%c0_42, %c0_43, %c6, %c0_44] : memref<1x4x16x8xf32, #tpu.memory_space<vmem>>, vector<1x4x1x8xf32>
    %50 = vector.shape_cast %49 : vector<1x4x1x8xf32> to vector<4x1x8xf32>
    %c0_45 = arith.constant 0 : index
    %c6_46 = arith.constant 6 : index
    %c0_47 = arith.constant 0 : index
    %c0_48 = arith.constant 0 : index
    %51 = vector.load %arg3[%c0_45, %c6_46, %c0_47, %c0_48] : memref<1x16x16x8xf32, #tpu.memory_space<vmem>>, vector<1x1x16x8xf32>
    %52 = vector.shape_cast %51 : vector<1x1x16x8xf32> to vector<1x16x8xf32>
    %53 = vector.broadcast %50 : vector<4x1x8xf32> to vector<4x16x8xf32>
    %54 = vector.broadcast %52 : vector<1x16x8xf32> to vector<4x16x8xf32>
    %55 = arith.mulf %53, %54 : vector<4x16x8xf32>
    %56 = arith.addf %48, %55 : vector<4x16x8xf32>
    %c0_49 = arith.constant 0 : index
    %c0_50 = arith.constant 0 : index
    %c7 = arith.constant 7 : index
    %c0_51 = arith.constant 0 : index
    %57 = vector.load %arg2[%c0_49, %c0_50, %c7, %c0_51] : memref<1x4x16x8xf32, #tpu.memory_space<vmem>>, vector<1x4x1x8xf32>
    %58 = vector.shape_cast %57 : vector<1x4x1x8xf32> to vector<4x1x8xf32>
    %c0_52 = arith.constant 0 : index
    %c7_53 = arith.constant 7 : index
    %c0_54 = arith.constant 0 : index
    %c0_55 = arith.constant 0 : index
    %59 = vector.load %arg3[%c0_52, %c7_53, %c0_54, %c0_55] : memref<1x16x16x8xf32, #tpu.memory_space<vmem>>, vector<1x1x16x8xf32>
    %60 = vector.shape_cast %59 : vector<1x1x16x8xf32> to vector<1x16x8xf32>
    %61 = vector.broadcast %58 : vector<4x1x8xf32> to vector<4x16x8xf32>
    %62 = vector.broadcast %60 : vector<1x16x8xf32> to vector<4x16x8xf32>
    %63 = arith.mulf %61, %62 : vector<4x16x8xf32>
    %64 = arith.addf %56, %63 : vector<4x16x8xf32>
    %c0_56 = arith.constant 0 : index
    %c0_57 = arith.constant 0 : index
    %c8 = arith.constant 8 : index
    %c0_58 = arith.constant 0 : index
    %65 = vector.load %arg2[%c0_56, %c0_57, %c8, %c0_58] : memref<1x4x16x8xf32, #tpu.memory_space<vmem>>, vector<1x4x1x8xf32>
    %66 = vector.shape_cast %65 : vector<1x4x1x8xf32> to vector<4x1x8xf32>
    %c0_59 = arith.constant 0 : index
    %c8_60 = arith.constant 8 : index
    %c0_61 = arith.constant 0 : index
    %c0_62 = arith.constant 0 : index
    %67 = vector.load %arg3[%c0_59, %c8_60, %c0_61, %c0_62] : memref<1x16x16x8xf32, #tpu.memory_space<vmem>>, vector<1x1x16x8xf32>
    %68 = vector.shape_cast %67 : vector<1x1x16x8xf32> to vector<1x16x8xf32>
    %69 = vector.broadcast %66 : vector<4x1x8xf32> to vector<4x16x8xf32>
    %70 = vector.broadcast %68 : vector<1x16x8xf32> to vector<4x16x8xf32>
    %71 = arith.mulf %69, %70 : vector<4x16x8xf32>
    %72 = arith.addf %64, %71 : vector<4x16x8xf32>
    %c0_63 = arith.constant 0 : index
    %c0_64 = arith.constant 0 : index
    %c9 = arith.constant 9 : index
    %c0_65 = arith.constant 0 : index
    %73 = vector.load %arg2[%c0_63, %c0_64, %c9, %c0_65] : memref<1x4x16x8xf32, #tpu.memory_space<vmem>>, vector<1x4x1x8xf32>
    %74 = vector.shape_cast %73 : vector<1x4x1x8xf32> to vector<4x1x8xf32>
    %c0_66 = arith.constant 0 : index
    %c9_67 = arith.constant 9 : index
    %c0_68 = arith.constant 0 : index
    %c0_69 = arith.constant 0 : index
    %75 = vector.load %arg3[%c0_66, %c9_67, %c0_68, %c0_69] : memref<1x16x16x8xf32, #tpu.memory_space<vmem>>, vector<1x1x16x8xf32>
    %76 = vector.shape_cast %75 : vector<1x1x16x8xf32> to vector<1x16x8xf32>
    %77 = vector.broadcast %74 : vector<4x1x8xf32> to vector<4x16x8xf32>
    %78 = vector.broadcast %76 : vector<1x16x8xf32> to vector<4x16x8xf32>
    %79 = arith.mulf %77, %78 : vector<4x16x8xf32>
    %80 = arith.addf %72, %79 : vector<4x16x8xf32>
    %c0_70 = arith.constant 0 : index
    %c0_71 = arith.constant 0 : index
    %c10 = arith.constant 10 : index
    %c0_72 = arith.constant 0 : index
    %81 = vector.load %arg2[%c0_70, %c0_71, %c10, %c0_72] : memref<1x4x16x8xf32, #tpu.memory_space<vmem>>, vector<1x4x1x8xf32>
    %82 = vector.shape_cast %81 : vector<1x4x1x8xf32> to vector<4x1x8xf32>
    %c0_73 = arith.constant 0 : index
    %c10_74 = arith.constant 10 : index
    %c0_75 = arith.constant 0 : index
    %c0_76 = arith.constant 0 : index
    %83 = vector.load %arg3[%c0_73, %c10_74, %c0_75, %c0_76] : memref<1x16x16x8xf32, #tpu.memory_space<vmem>>, vector<1x1x16x8xf32>
    %84 = vector.shape_cast %83 : vector<1x1x16x8xf32> to vector<1x16x8xf32>
    %85 = vector.broadcast %82 : vector<4x1x8xf32> to vector<4x16x8xf32>
    %86 = vector.broadcast %84 : vector<1x16x8xf32> to vector<4x16x8xf32>
    %87 = arith.mulf %85, %86 : vector<4x16x8xf32>
    %88 = arith.addf %80, %87 : vector<4x16x8xf32>
    %c0_77 = arith.constant 0 : index
    %c0_78 = arith.constant 0 : index
    %c11 = arith.constant 11 : index
    %c0_79 = arith.constant 0 : index
    %89 = vector.load %arg2[%c0_77, %c0_78, %c11, %c0_79] : memref<1x4x16x8xf32, #tpu.memory_space<vmem>>, vector<1x4x1x8xf32>
    %90 = vector.shape_cast %89 : vector<1x4x1x8xf32> to vector<4x1x8xf32>
    %c0_80 = arith.constant 0 : index
    %c11_81 = arith.constant 11 : index
    %c0_82 = arith.constant 0 : index
    %c0_83 = arith.constant 0 : index
    %91 = vector.load %arg3[%c0_80, %c11_81, %c0_82, %c0_83] : memref<1x16x16x8xf32, #tpu.memory_space<vmem>>, vector<1x1x16x8xf32>
    %92 = vector.shape_cast %91 : vector<1x1x16x8xf32> to vector<1x16x8xf32>
    %93 = vector.broadcast %90 : vector<4x1x8xf32> to vector<4x16x8xf32>
    %94 = vector.broadcast %92 : vector<1x16x8xf32> to vector<4x16x8xf32>
    %95 = arith.mulf %93, %94 : vector<4x16x8xf32>
    %96 = arith.addf %88, %95 : vector<4x16x8xf32>
    %c0_84 = arith.constant 0 : index
    %c0_85 = arith.constant 0 : index
    %c12 = arith.constant 12 : index
    %c0_86 = arith.constant 0 : index
    %97 = vector.load %arg2[%c0_84, %c0_85, %c12, %c0_86] : memref<1x4x16x8xf32, #tpu.memory_space<vmem>>, vector<1x4x1x8xf32>
    %98 = vector.shape_cast %97 : vector<1x4x1x8xf32> to vector<4x1x8xf32>
    %c0_87 = arith.constant 0 : index
    %c12_88 = arith.constant 12 : index
    %c0_89 = arith.constant 0 : index
    %c0_90 = arith.constant 0 : index
    %99 = vector.load %arg3[%c0_87, %c12_88, %c0_89, %c0_90] : memref<1x16x16x8xf32, #tpu.memory_space<vmem>>, vector<1x1x16x8xf32>
    %100 = vector.shape_cast %99 : vector<1x1x16x8xf32> to vector<1x16x8xf32>
    %101 = vector.broadcast %98 : vector<4x1x8xf32> to vector<4x16x8xf32>
    %102 = vector.broadcast %100 : vector<1x16x8xf32> to vector<4x16x8xf32>
    %103 = arith.mulf %101, %102 : vector<4x16x8xf32>
    %104 = arith.addf %96, %103 : vector<4x16x8xf32>
    %c0_91 = arith.constant 0 : index
    %c0_92 = arith.constant 0 : index
    %c13 = arith.constant 13 : index
    %c0_93 = arith.constant 0 : index
    %105 = vector.load %arg2[%c0_91, %c0_92, %c13, %c0_93] : memref<1x4x16x8xf32, #tpu.memory_space<vmem>>, vector<1x4x1x8xf32>
    %106 = vector.shape_cast %105 : vector<1x4x1x8xf32> to vector<4x1x8xf32>
    %c0_94 = arith.constant 0 : index
    %c13_95 = arith.constant 13 : index
    %c0_96 = arith.constant 0 : index
    %c0_97 = arith.constant 0 : index
    %107 = vector.load %arg3[%c0_94, %c13_95, %c0_96, %c0_97] : memref<1x16x16x8xf32, #tpu.memory_space<vmem>>, vector<1x1x16x8xf32>
    %108 = vector.shape_cast %107 : vector<1x1x16x8xf32> to vector<1x16x8xf32>
    %109 = vector.broadcast %106 : vector<4x1x8xf32> to vector<4x16x8xf32>
    %110 = vector.broadcast %108 : vector<1x16x8xf32> to vector<4x16x8xf32>
    %111 = arith.mulf %109, %110 : vector<4x16x8xf32>
    %112 = arith.addf %104, %111 : vector<4x16x8xf32>
    %c0_98 = arith.constant 0 : index
    %c0_99 = arith.constant 0 : index
    %c14 = arith.constant 14 : index
    %c0_100 = arith.constant 0 : index
    %113 = vector.load %arg2[%c0_98, %c0_99, %c14, %c0_100] : memref<1x4x16x8xf32, #tpu.memory_space<vmem>>, vector<1x4x1x8xf32>
    %114 = vector.shape_cast %113 : vector<1x4x1x8xf32> to vector<4x1x8xf32>
    %c0_101 = arith.constant 0 : index
    %c14_102 = arith.constant 14 : index
    %c0_103 = arith.constant 0 : index
    %c0_104 = arith.constant 0 : index
    %115 = vector.load %arg3[%c0_101, %c14_102, %c0_103, %c0_104] : memref<1x16x16x8xf32, #tpu.memory_space<vmem>>, vector<1x1x16x8xf32>
    %116 = vector.shape_cast %115 : vector<1x1x16x8xf32> to vector<1x16x8xf32>
    %117 = vector.broadcast %114 : vector<4x1x8xf32> to vector<4x16x8xf32>
    %118 = vector.broadcast %116 : vector<1x16x8xf32> to vector<4x16x8xf32>
    %119 = arith.mulf %117, %118 : vector<4x16x8xf32>
    %120 = arith.addf %112, %119 : vector<4x16x8xf32>
    %c0_105 = arith.constant 0 : index
    %c0_106 = arith.constant 0 : index
    %c15 = arith.constant 15 : index
    %c0_107 = arith.constant 0 : index
    %121 = vector.load %arg2[%c0_105, %c0_106, %c15, %c0_107] : memref<1x4x16x8xf32, #tpu.memory_space<vmem>>, vector<1x4x1x8xf32>
    %122 = vector.shape_cast %121 : vector<1x4x1x8xf32> to vector<4x1x8xf32>
    %c0_108 = arith.constant 0 : index
    %c15_109 = arith.constant 15 : index
    %c0_110 = arith.constant 0 : index
    %c0_111 = arith.constant 0 : index
    %123 = vector.load %arg3[%c0_108, %c15_109, %c0_110, %c0_111] : memref<1x16x16x8xf32, #tpu.memory_space<vmem>>, vector<1x1x16x8xf32>
    %124 = vector.shape_cast %123 : vector<1x1x16x8xf32> to vector<1x16x8xf32>
    %125 = vector.broadcast %122 : vector<4x1x8xf32> to vector<4x16x8xf32>
    %126 = vector.broadcast %124 : vector<1x16x8xf32> to vector<4x16x8xf32>
    %127 = arith.mulf %125, %126 : vector<4x16x8xf32>
    %128 = arith.addf %120, %127 : vector<4x16x8xf32>
    %c0_112 = arith.constant 0 : index
    %c0_113 = arith.constant 0 : index
    %c0_114 = arith.constant 0 : index
    %c0_115 = arith.constant 0 : index
    %129 = vector.load %arg4[%c0_112, %c0_113, %c0_114, %c0_115] : memref<1x4x16x8xf32, #tpu.memory_space<vmem>>, vector<1x4x16x8xf32>
    %130 = vector.shape_cast %129 : vector<1x4x16x8xf32> to vector<4x16x8xf32>
    %131 = vector.shape_cast %128 : vector<4x16x8xf32> to vector<1x4x16x8xf32>
    tpu.vector_store %arg4[%c0_112, %c0_113, %c0_114, %c0_115], %131 {strides = array<i32>} : memref<1x4x16x8xf32, #tpu.memory_space<vmem>>, vector<1x4x16x8xf32>,
    return
  }
  func.func @transform_0(%arg0: i32, %arg1: i32) -> (i32, i32, i32, i32) {
    %c0_i32 = arith.constant 0 : i32
    %c0_i32_0 = arith.constant 0 : i32
    %c0_i32_1 = arith.constant 0 : i32
    return %arg0, %c0_i32, %c0_i32_0, %arg1 : i32, i32, i32, i32
  }
  func.func @transform_1(%arg0: i32, %arg1: i32) -> (i32, i32, i32, i32) {
    %c0_i32 = arith.constant 0 : i32
    %c0_i32_0 = arith.constant 0 : i32
    %c0_i32_1 = arith.constant 0 : i32
    return %arg0, %c0_i32, %c0_i32_0, %arg1 : i32, i32, i32, i32
  }
  func.func @transform_2(%arg0: i32, %arg1: i32) -> (i32, i32, i32, i32) {
    %c0_i32 = arith.constant 0 : i32
    %c0_i32_0 = arith.constant 0 : i32
    %c0_i32_1 = arith.constant 0 : i32
    return %arg0, %c0_i32, %c0_i32_0, %arg1 : i32, i32, i32, i32
  }
}

</mosaic_0001>

<llo_original>
// kernel: tpu_custom_call.1
$region0: #{tpu_custom_call.1}
  #allocation0 [shape = 'u32[]', space=smem, size = 0x4, offset = 0x4, fixed_abs, tag = 'smem constant byte address 0x4 - core index']
  #allocation1 [shape = 'u32[144,128]{1,0:T(1,128)}', space=vmem, size = 0x12000, scoped, tag = 'internal scratch']
  %s0 = inlined_call_operand.vmem [shape: f32[2,4,16,8], index: 0, kind: input, shape index: {}]
  %s1 = inlined_call_operand.vmem [shape: f32[2,16,16,8], index: 1, kind: input, shape index: {}]
  %s2 = inlined_call_operand.vmem [shape: f32[2,4,16,8], index: 2, kind: output, shape index: {}]
  %s3 = sld [smem:[#allocation0]]
  $region41: #{tpu_custom_call.1} parent=0
    _
  %s5 = ssub.s32 1, %s3
  %s6 = scalar_select 0, %s5, %s3
  loop: start=0, step=1, limit=4
  $region2: #{tpu_custom_call.1} parent=0 // loop_pre_header
    _
  $region3: #{tpu_custom_call.1} parent=0 // loop_header
    %s8 = sphi 0, %s12
    %p9 = scmp.ge.s32.totalorder %s8, 4
    %s15 = sphi 0, %s27
    %s16 = sphi 0, %s23
    %s17 = sphi 0, %s15
    %s18 = sphi 0, %s16
    %s19 = sphi 0, %s17
    %s20 = sphi 0, %s18
    %s32 = sphi 0, %s34
    %s35 = sphi 0, %s32
    %s36 = sphi 0, %s35
    %s52 = sphi 0, %s36
    %s60 = sphi 0, %s62
    %s63 = sphi 0, %s60
    %s64 = sphi 0, %s63
    %s80 = sphi 0, %s64
    %s88 = sphi 0, %s90
    %s91 = sphi 0, %s88
    %s92 = sphi 0, %s91
    %s108 = sphi 0, %s92
  $region4: #{tpu_custom_call.1} parent=0 // loop_header_branch
    %11 = sbr.rel (%p9) target = $region8
  $region5: #{tpu_custom_call.1} parent=0 // loop_body
    %s13 = ssub.s32 %s8, 1
    %s14 = ssub.s32 %s8, 2
    %s21 = sadd.s32 1, %s16
    %p22 = scmp.ge.s32.totalorder %s21, 1
    %s23 = scalar_select %p22, 0, %s21
    %s24 = sadd.s32 1, %s15
    %s25 = scalar_select %p22, %s24, %s15
    %p26 = scmp.ge.s32.totalorder %s25, 2
    %s27 = scalar_select %p26, 0, %s25
    %s28 = ssub.s32 %s15, %s27
    %s29 = ssub.s32 %s16, %s23
    %s30 = sor.u32 %s28, %s29
    %p31 = scmp.eq.s32.totalorder %s30, 0
    %s33 = sadd.s32 %s32, 1
    %s34 = scalar_select %p31, %s32, %s33
    %p37 = pneg %p31
    %p38 = scmp.eq.s32.totalorder %s8, 1
    %p39 = por %p37, %p38
    %p40 = scmp.ne.s32.totalorder %s32, %s35
    %p41 = scmp.eq.s32.totalorder %s8, 0
    %p42 = por %p40, %p41
    %p43 = scmp.ne.s32.totalorder %s32, %s35
    %p44 = scmp.eq.s32.totalorder %s13, 1
    %p45 = por %p43, %p44
    %p46 = scmp.ne.s32.totalorder %s35, %s36
    %p47 = scmp.eq.s32.totalorder %s13, 0
    %p48 = por %p46, %p47
    %p49 = scmp.ne.s32.totalorder %s35, %s36
    %p50 = scmp.eq.s32.totalorder %s14, 1
    %p51 = por %p49, %p50
    %p53 = scmp.ne.s32.totalorder %s36, %s52
    %p54 = scmp.eq.s32.totalorder %s14, 0
    %p55 = por %p53, %p54
    %s56 = ssub.s32 %s15, %s27
    %s57 = ssub.s32 %s16, %s23
    %s58 = sor.u32 %s56, %s57
    %p59 = scmp.eq.s32.totalorder %s58, 0
    %s61 = sadd.s32 %s60, 1
    %s62 = scalar_select %p59, %s60, %s61
    %p65 = pneg %p59
    %p66 = scmp.eq.s32.totalorder %s8, 1
    %p67 = por %p65, %p66
    %p68 = scmp.ne.s32.totalorder %s60, %s63
    %p69 = scmp.eq.s32.totalorder %s8, 0
    %p70 = por %p68, %p69
    %p71 = scmp.ne.s32.totalorder %s60, %s63
    %p72 = scmp.eq.s32.totalorder %s13, 1
    %p73 = por %p71, %p72
    %p74 = scmp.ne.s32.totalorder %s63, %s64
    %p75 = scmp.eq.s32.totalorder %s13, 0
    %p76 = por %p74, %p75
    %p77 = scmp.ne.s32.totalorder %s63, %s64
    %p78 = scmp.eq.s32.totalorder %s14, 1
    %p79 = por %p77, %p78
    %p81 = scmp.ne.s32.totalorder %s64, %s80
    %p82 = scmp.eq.s32.totalorder %s14, 0
    %p83 = por %p81, %p82
    %s84 = ssub.s32 %s15, %s27
    %s85 = ssub.s32 %s16, %s23
    %s86 = sor.u32 %s84, %s85
    %p87 = scmp.eq.s32.totalorder %s86, 0
    %s89 = sadd.s32 %s88, 1
    %s90 = scalar_select %p87, %s88, %s89
    %p93 = pneg %p87
    %p94 = scmp.eq.s32.totalorder %s8, 1
    %p95 = por %p93, %p94
    %p96 = scmp.ne.s32.totalorder %s88, %s91
    %p97 = scmp.eq.s32.totalorder %s8, 0
    %p98 = por %p96, %p97
    %p99 = scmp.ne.s32.totalorder %s88, %s91
    %p100 = scmp.eq.s32.totalorder %s13, 1
    %p101 = por %p99, %p100
    %p102 = scmp.ne.s32.totalorder %s91, %s92
    %p103 = scmp.eq.s32.totalorder %s13, 0
    %p104 = por %p102, %p103
    %p105 = scmp.ne.s32.totalorder %s91, %s92
    %p106 = scmp.eq.s32.totalorder %s14, 1
    %p107 = por %p105, %p106
    %p109 = scmp.ne.s32.totalorder %s92, %s108
    %p110 = scmp.eq.s32.totalorder %s14, 0
    %p111 = por %p109, %p110
    %p112 = scmp.le.s32.totalorder 1, %s8
    %p113 = scmp.lt.s32.totalorder %s8, 3
    %p114 = pnand %p112, %p113
    %p115 = pneg %p114
    // Predicated region
    $region9: #{tpu_custom_call.1} parent=5 // pred_check
      _
    $region10: #{tpu_custom_call.1} parent=5 // pred_check_branch
      %117 = sbr.rel (%p114) target = $region12
    $region11: #{tpu_custom_call.1} parent=5 // pred_region
      %s118 = ssub.s32 %s8, 1
    $region12: #{tpu_custom_call.1} parent=5 // pred_fallthru
      _
    %p119 = scmp.lt.s32.totalorder %s8, 2
    // Predicated region
    $region13: #{tpu_custom_call.1} parent=5 // pred_check
      %p120 = pneg %p119
    $region14: #{tpu_custom_call.1} parent=5 // pred_check_branch
      %122 = sbr.rel (%p120) target = $region16
    $region15: #{tpu_custom_call.1} parent=5 // pred_region
      // Predicated region
      $region17: #{tpu_custom_call.1} parent=15 // pred_check
        %p123 = pneg %p42
      $region18: #{tpu_custom_call.1} parent=15 // pred_check_branch
        %125 = sbr.rel (%p123) target = $region20
      $region19: #{tpu_custom_call.1} parent=15 // pred_region
        %p126 = scmp.lt.s32.totalorder %s15, 1
        %s127 = scalar_select %p126, %s15, 1
        %p128 = scmp.lt.s32.totalorder %s16, 0
        %s129 = scalar_select %p128, %s16, 0
        %s130 = smul.addr %s127, 8
        %s131 = sadd.s32 %s129, %s130
        %s132 = smul.addr %s131, 8
        %s133 = scalar_lea.vmem %s0, %s132
      $region20: #{tpu_custom_call.1} parent=15 // pred_fallthru
        _
      // Predicated region
      $region21: #{tpu_custom_call.1} parent=15 // pred_check
        %p134 = pneg %p70
      $region22: #{tpu_custom_call.1} parent=15 // pred_check_branch
        %136 = sbr.rel (%p134) target = $region24
      $region23: #{tpu_custom_call.1} parent=15 // pred_region
        %p137 = scmp.lt.s32.totalorder %s15, 1
        %s138 = scalar_select %p137, %s15, 1
        %p139 = scmp.lt.s32.totalorder %s16, 0
        %s140 = scalar_select %p139, %s16, 0
        %s141 = smul.addr %s138, 32
        %s142 = sadd.s32 %s140, %s141
        %s143 = smul.addr %s142, 8
        %s144 = scalar_lea.vmem %s1, %s143
      $region24: #{tpu_custom_call.1} parent=15 // pred_fallthru
        _
    $region16: #{tpu_custom_call.1} parent=5 // pred_fallthru
      _
    %p145 = scmp.le.s32.totalorder 1, %s8
    %p146 = scmp.lt.s32.totalorder %s8, 3
    %p147 = pnand %p145, %p146
    %p148 = pneg %p147
    // Predicated region
    $region25: #{tpu_custom_call.1} parent=5 // pred_check
      _
    $region26: #{tpu_custom_call.1} parent=5 // pred_check_branch
      %150 = sbr.rel (%p147) target = $region28
    $region27: #{tpu_custom_call.1} parent=5 // pred_region
      %s151 = ssub.s32 %s8, 1
      %p152 = scmp.lt.s32.totalorder %s17, 1
      %s153 = scalar_select %p152, %s17, 1
      %p154 = scmp.lt.s32.totalorder %s18, 0
      %s155 = scalar_select %p154, %s18, 0
      %s156 = smul.addr %s153, 8
      %s157 = sadd.s32 %s155, %s156
      %s158 = smul.addr %s157, 8
      %s159 = scalar_lea.vmem %s0, %s158
      %p160 = pneg %p48
      %p161 = pneg %p45
      %p162 = scmp.lt.s32.totalorder %s17, 1
      %s163 = scalar_select %p162, %s17, 1
      %p164 = scmp.lt.s32.totalorder %s18, 0
      %s165 = scalar_select %p164, %s18, 0
      %s166 = smul.addr %s163, 32
      %s167 = sadd.s32 %s165, %s166
      %s168 = smul.addr %s167, 8
      %s169 = scalar_lea.vmem %s1, %s168
      %p170 = pneg %p76
      %p171 = pneg %p73
      %p172 = pneg %p104
      %p173 = pneg %p101
      %p174 = scmp.lt.s32.totalorder %s17, 1
      %s175 = scalar_select %p174, %s17, 1
      %p176 = scmp.lt.s32.totalorder %s18, 0
      %s177 = scalar_select %p176, %s18, 0
      %s178 = smul.addr %s175, 8
      %s179 = sadd.s32 %s177, %s178
      %s180 = smul.addr %s179, 8
      %s181 = scalar_lea.vmem %s2, %s180
      %p182 = scmp.lt.s32.totalorder %s17, 1
      %s183 = scalar_select %p182, %s17, 1
      %p184 = scmp.lt.s32.totalorder %s18, 0
      %s185 = scalar_select %p184, %s18, 0
      %s186 = smul.addr %s183, 8
      %s187 = sadd.s32 %s185, %s186
      %s188 = smul.addr %s187, 8
      %s189 = scalar_lea.vmem %s0, %s188
      %p190 = scmp.lt.s32.totalorder %s17, 1
      %s191 = scalar_select %p190, %s17, 1
      %p192 = scmp.lt.s32.totalorder %s18, 0
      %s193 = scalar_select %p192, %s18, 0
      %s194 = smul.addr %s191, 32
      %s195 = sadd.s32 %s193, %s194
      %s196 = smul.addr %s195, 8
      %s197 = scalar_lea.vmem %s1, %s196
      %p198 = scmp.lt.s32.totalorder %s17, 1
      %s199 = scalar_select %p198, %s17, 1
      %p200 = scmp.lt.s32.totalorder %s18, 0
      %s201 = scalar_select %p200, %s18, 0
      %s202 = smul.addr %s199, 8
      %s203 = sadd.s32 %s201, %s202
      %s204 = smul.addr %s203, 8
      %s205 = scalar_lea.vmem %s2, %s204
      %v206 = vld [vmem:[%s189] sm:$0x1]
      %v207 = vld [vmem:[%s189 + $0x10] sm:$0x1]
      %v208 = vld [vmem:[%s189 + $0x20] sm:$0x1]
      %v209 = vld [vmem:[%s189 + $0x30] sm:$0x1]
      %v210 = vld [vmem:[%s197] sm:$0xff]
      %v211 = vld [vmem:[%s197 + $0x8] sm:$0xff]
      %v212 = vlaneseq
      %v213 = vshrl.u32 %v212, 7
      %v214 = vsub.s32 0, %v213
      %v215 = vrot.slane %v206, %v214
      %v216 = vlaneseq
      %v217 = vshrl.u32 %v216, 7
      %v218 = vsub.s32 0, %v217
      %v219 = vrot.slane %v207, %v218
      %v220 = vlaneseq
      %v221 = vshrl.u32 %v220, 7
      %v222 = vsub.s32 0, %v221
      %v223 = vrot.slane %v208, %v222
      %v224 = vlaneseq
      %v225 = vshrl.u32 %v224, 7
      %v226 = vsub.s32 0, %v225
      %v227 = vrot.slane %v209, %v226
      %v228 = vmul.f32 %v215, %v210
      %v229 = vmul.f32 %v215, %v211
      %v230 = vmul.f32 %v219, %v210
      %v231 = vmul.f32 %v219, %v211
      %v232 = vmul.f32 %v223, %v210
      %v233 = vmul.f32 %v223, %v211
      %v234 = vmul.f32 %v227, %v210
      %v235 = vmul.f32 %v227, %v211
      %v236 = vadd.f32 %v228, 0.0
      %v237 = vadd.f32 %v229, 0.0
      %v238 = vadd.f32 %v230, 0.0
      %v239 = vadd.f32 %v231, 0.0
      %v240 = vadd.f32 %v232, 0.0
      %v241 = vadd.f32 %v233, 0.0
      %v242 = vadd.f32 %v234, 0.0
      %v243 = vadd.f32 %v235, 0.0
      %v244 = vld [vmem:[%s189 + $0x1] sm:$0x1]
      %v245 = vld [vmem:[%s189 + $0x11] sm:$0x1]
      %v246 = vld [vmem:[%s189 + $0x21] sm:$0x1]
      %v247 = vld [vmem:[%s189 + $0x31] sm:$0x1]
      %s248 = scalar_lea.vmem %s197, 16
      %v249 = vld [vmem:[%s248] sm:$0xff]
      %v250 = vld [vmem:[%s248 + $0x8] sm:$0xff]
      %v251 = vlaneseq
      %v252 = vshrl.u32 %v251, 7
      %v253 = vsub.s32 0, %v252
      %v254 = vrot.slane %v244, %v253
      %v255 = vlaneseq
      %v256 = vshrl.u32 %v255, 7
      %v257 = vsub.s32 0, %v256
      %v258 = vrot.slane %v245, %v257
      %v259 = vlaneseq
      %v260 = vshrl.u32 %v259, 7
      %v261 = vsub.s32 0, %v260
      %v262 = vrot.slane %v246, %v261
      %v263 = vlaneseq
      %v264 = vshrl.u32 %v263, 7
      %v265 = vsub.s32 0, %v264
      %v266 = vrot.slane %v247, %v265
      %v267 = vmul.f32 %v254, %v249
      %v268 = vmul.f32 %v254, %v250
      %v269 = vmul.f32 %v258, %v249
      %v270 = vmul.f32 %v258, %v250
      %v271 = vmul.f32 %v262, %v249
      %v272 = vmul.f32 %v262, %v250
      %v273 = vmul.f32 %v266, %v249
      %v274 = vmul.f32 %v266, %v250
      %v275 = vadd.f32 %v236, %v267
      %v276 = vadd.f32 %v237, %v268
      %v277 = vadd.f32 %v238, %v269
      %v278 = vadd.f32 %v239, %v270
      %v279 = vadd.f32 %v240, %v271
      %v280 = vadd.f32 %v241, %v272
      %v281 = vadd.f32 %v242, %v273
      %v282 = vadd.f32 %v243, %v274
      %v283 = vld [vmem:[%s189 + $0x2] sm:$0x1]
      %v284 = vld [vmem:[%s189 + $0x12] sm:$0x1]
      %v285 = vld [vmem:[%s189 + $0x22] sm:$0x1]
      %v286 = vld [vmem:[%s189 + $0x32] sm:$0x1]
      %s287 = scalar_lea.vmem %s197, 32
      %v288 = vld [vmem:[%s287] sm:$0xff]
      %v289 = vld [vmem:[%s287 + $0x8] sm:$0xff]
      %v290 = vlaneseq
      %v291 = vshrl.u32 %v290, 7
      %v292 = vsub.s32 0, %v291
      %v293 = vrot.slane %v283, %v292
      %v294 = vlaneseq
      %v295 = vshrl.u32 %v294, 7
      %v296 = vsub.s32 0, %v295
      %v297 = vrot.slane %v284, %v296
      %v298 = vlaneseq
      %v299 = vshrl.u32 %v298, 7
      %v300 = vsub.s32 0, %v299
      %v301 = vrot.slane %v285, %v300
      %v302 = vlaneseq
      %v303 = vshrl.u32 %v302, 7
      %v304 = vsub.s32 0, %v303
      %v305 = vrot.slane %v286, %v304
      %v306 = vmul.f32 %v293, %v288
      %v307 = vmul.f32 %v293, %v289
      %v308 = vmul.f32 %v297, %v288
      %v309 = vmul.f32 %v297, %v289
      %v310 = vmul.f32 %v301, %v288
      %v311 = vmul.f32 %v301, %v289
      %v312 = vmul.f32 %v305, %v288
      %v313 = vmul.f32 %v305, %v289
      %v314 = vadd.f32 %v275, %v306
      %v315 = vadd.f32 %v276, %v307
      %v316 = vadd.f32 %v277, %v308
      %v317 = vadd.f32 %v278, %v309
      %v318 = vadd.f32 %v279, %v310
      %v319 = vadd.f32 %v280, %v311
      %v320 = vadd.f32 %v281, %v312
      %v321 = vadd.f32 %v282, %v313
      %v322 = vld [vmem:[%s189 + $0x3] sm:$0x1]
      %v323 = vld [vmem:[%s189 + $0x13] sm:$0x1]
      %v324 = vld [vmem:[%s189 + $0x23] sm:$0x1]
      %v325 = vld [vmem:[%s189 + $0x33] sm:$0x1]
      %s326 = scalar_lea.vmem %s197, 48
      %v327 = vld [vmem:[%s326] sm:$0xff]
      %v328 = vld [vmem:[%s326 + $0x8] sm:$0xff]
      %v329 = vlaneseq
      %v330 = vshrl.u32 %v329, 7
      %v331 = vsub.s32 0, %v330
      %v332 = vrot.slane %v322, %v331
      %v333 = vlaneseq
      %v334 = vshrl.u32 %v333, 7
      %v335 = vsub.s32 0, %v334
      %v336 = vrot.slane %v323, %v335
      %v337 = vlaneseq
      %v338 = vshrl.u32 %v337, 7
      %v339 = vsub.s32 0, %v338
      %v340 = vrot.slane %v324, %v339
      %v341 = vlaneseq
      %v342 = vshrl.u32 %v341, 7
      %v343 = vsub.s32 0, %v342
      %v344 = vrot.slane %v325, %v343
      %v345 = vmul.f32 %v332, %v327
      %v346 = vmul.f32 %v332, %v328
      %v347 = vmul.f32 %v336, %v327
      %v348 = vmul.f32 %v336, %v328
      %v349 = vmul.f32 %v340, %v327
      %v350 = vmul.f32 %v340, %v328
      %v351 = vmul.f32 %v344, %v327
      %v352 = vmul.f32 %v344, %v328
      %v353 = vadd.f32 %v314, %v345
      %v354 = vadd.f32 %v315, %v346
      %v355 = vadd.f32 %v316, %v347
      %v356 = vadd.f32 %v317, %v348
      %v357 = vadd.f32 %v318, %v349
      %v358 = vadd.f32 %v319, %v350
      %v359 = vadd.f32 %v320, %v351
      %v360 = vadd.f32 %v321, %v352
      %v361 = vld [vmem:[%s189 + $0x4] sm:$0x1]
      %v362 = vld [vmem:[%s189 + $0x14] sm:$0x1]
      %v363 = vld [vmem:[%s189 + $0x24] sm:$0x1]
      %v364 = vld [vmem:[%s189 + $0x34] sm:$0x1]
      %s365 = scalar_lea.vmem %s197, 64
      %v366 = vld [vmem:[%s365] sm:$0xff]
      %v367 = vld [vmem:[%s365 + $0x8] sm:$0xff]
      %v368 = vlaneseq
      %v369 = vshrl.u32 %v368, 7
      %v370 = vsub.s32 0, %v369
      %v371 = vrot.slane %v361, %v370
      %v372 = vlaneseq
      %v373 = vshrl.u32 %v372, 7
      %v374 = vsub.s32 0, %v373
      %v375 = vrot.slane %v362, %v374
      %v376 = vlaneseq
      %v377 = vshrl.u32 %v376, 7
      %v378 = vsub.s32 0, %v377
      %v379 = vrot.slane %v363, %v378
      %v380 = vlaneseq
      %v381 = vshrl.u32 %v380, 7
      %v382 = vsub.s32 0, %v381
      %v383 = vrot.slane %v364, %v382
      %v384 = vmul.f32 %v371, %v366
      %v385 = vmul.f32 %v371, %v367
      %v386 = vmul.f32 %v375, %v366
      %v387 = vmul.f32 %v375, %v367
      %v388 = vmul.f32 %v379, %v366
      %v389 = vmul.f32 %v379, %v367
      %v390 = vmul.f32 %v383, %v366
      %v391 = vmul.f32 %v383, %v367
      %v392 = vadd.f32 %v353, %v384
      %v393 = vadd.f32 %v354, %v385
      %v394 = vadd.f32 %v355, %v386
      %v395 = vadd.f32 %v356, %v387
      %v396 = vadd.f32 %v357, %v388
      %v397 = vadd.f32 %v358, %v389
      %v398 = vadd.f32 %v359, %v390
      %v399 = vadd.f32 %v360, %v391
      %v400 = vld [vmem:[%s189 + $0x5] sm:$0x1]
      %v401 = vld [vmem:[%s189 + $0x15] sm:$0x1]
      %v402 = vld [vmem:[%s189 + $0x25] sm:$0x1]
      %v403 = vld [vmem:[%s189 + $0x35] sm:$0x1]
      %s404 = scalar_lea.vmem %s197, 80
      %v405 = vld [vmem:[%s404] sm:$0xff]
      %v406 = vld [vmem:[%s404 + $0x8] sm:$0xff]
      %v407 = vlaneseq
      %v408 = vshrl.u32 %v407, 7
      %v409 = vsub.s32 0, %v408
      %v410 = vrot.slane %v400, %v409
      %v411 = vlaneseq
      %v412 = vshrl.u32 %v411, 7
      %v413 = vsub.s32 0, %v412
      %v414 = vrot.slane %v401, %v413
      %v415 = vlaneseq
      %v416 = vshrl.u32 %v415, 7
      %v417 = vsub.s32 0, %v416
      %v418 = vrot.slane %v402, %v417
      %v419 = vlaneseq
      %v420 = vshrl.u32 %v419, 7
      %v421 = vsub.s32 0, %v420
      %v422 = vrot.slane %v403, %v421
      %v423 = vmul.f32 %v410, %v405
      %v424 = vmul.f32 %v410, %v406
      %v425 = vmul.f32 %v414, %v405
      %v426 = vmul.f32 %v414, %v406
      %v427 = vmul.f32 %v418, %v405
      %v428 = vmul.f32 %v418, %v406
      %v429 = vmul.f32 %v422, %v405
      %v430 = vmul.f32 %v422, %v406
      %v431 = vadd.f32 %v392, %v423
      %v432 = vadd.f32 %v393, %v424
      %v433 = vadd.f32 %v394, %v425
      %v434 = vadd.f32 %v395, %v426
      %v435 = vadd.f32 %v396, %v427
      %v436 = vadd.f32 %v397, %v428
      %v437 = vadd.f32 %v398, %v429
      %v438 = vadd.f32 %v399, %v430
      %v439 = vld [vmem:[%s189 + $0x6] sm:$0x1]
      %v440 = vld [vmem:[%s189 + $0x16] sm:$0x1]
      %v441 = vld [vmem:[%s189 + $0x26] sm:$0x1]
      %v442 = vld [vmem:[%s189 + $0x36] sm:$0x1]
      %s443 = scalar_lea.vmem %s197, 96
      %v444 = vld [vmem:[%s443] sm:$0xff]
      %v445 = vld [vmem:[%s443 + $0x8] sm:$0xff]
      %v446 = vlaneseq
      %v447 = vshrl.u32 %v446, 7
      %v448 = vsub.s32 0, %v447
      %v449 = vrot.slane %v439, %v448
      %v450 = vlaneseq
      %v451 = vshrl.u32 %v450, 7
      %v452 = vsub.s32 0, %v451
      %v453 = vrot.slane %v440, %v452
      %v454 = vlaneseq
      %v455 = vshrl.u32 %v454, 7
      %v456 = vsub.s32 0, %v455
      %v457 = vrot.slane %v441, %v456
      %v458 = vlaneseq
      %v459 = vshrl.u32 %v458, 7
      %v460 = vsub.s32 0, %v459
      %v461 = vrot.slane %v442, %v460
      %v462 = vmul.f32 %v449, %v444
      %v463 = vmul.f32 %v449, %v445
      %v464 = vmul.f32 %v453, %v444
      %v465 = vmul.f32 %v453, %v445
      %v466 = vmul.f32 %v457, %v444
      %v467 = vmul.f32 %v457, %v445
      %v468 = vmul.f32 %v461, %v444
      %v469 = vmul.f32 %v461, %v445
      %v470 = vadd.f32 %v431, %v462
      %v471 = vadd.f32 %v432, %v463
      %v472 = vadd.f32 %v433, %v464
      %v473 = vadd.f32 %v434, %v465
      %v474 = vadd.f32 %v435, %v466
      %v475 = vadd.f32 %v436, %v467
      %v476 = vadd.f32 %v437, %v468
      %v477 = vadd.f32 %v438, %v469
      %v478 = vld [vmem:[%s189 + $0x7] sm:$0x1]
      %v479 = vld [vmem:[%s189 + $0x17] sm:$0x1]
      %v480 = vld [vmem:[%s189 + $0x27] sm:$0x1]
      %v481 = vld [vmem:[%s189 + $0x37] sm:$0x1]
      %s482 = scalar_lea.vmem %s197, 112
      %v483 = vld [vmem:[%s482] sm:$0xff]
      %v484 = vld [vmem:[%s482 + $0x8] sm:$0xff]
      %v485 = vlaneseq
      %v486 = vshrl.u32 %v485, 7
      %v487 = vsub.s32 0, %v486
      %v488 = vrot.slane %v478, %v487
      %v489 = vlaneseq
      %v490 = vshrl.u32 %v489, 7
      %v491 = vsub.s32 0, %v490
      %v492 = vrot.slane %v479, %v491
      %v493 = vlaneseq
      %v494 = vshrl.u32 %v493, 7
      %v495 = vsub.s32 0, %v494
      %v496 = vrot.slane %v480, %v495
      %v497 = vlaneseq
      %v498 = vshrl.u32 %v497, 7
      %v499 = vsub.s32 0, %v498
      %v500 = vrot.slane %v481, %v499
      %v501 = vmul.f32 %v488, %v483
      %v502 = vmul.f32 %v488, %v484
      %v503 = vmul.f32 %v492, %v483
      %v504 = vmul.f32 %v492, %v484
      %v505 = vmul.f32 %v496, %v483
      %v506 = vmul.f32 %v496, %v484
      %v507 = vmul.f32 %v500, %v483
      %v508 = vmul.f32 %v500, %v484
      %v509 = vadd.f32 %v470, %v501
      %v510 = vadd.f32 %v471, %v502
      %v511 = vadd.f32 %v472, %v503
      %v512 = vadd.f32 %v473, %v504
      %v513 = vadd.f32 %v474, %v505
      %v514 = vadd.f32 %v475, %v506
      %v515 = vadd.f32 %v476, %v507
      %v516 = vadd.f32 %v477, %v508
      %v517 = vld [vmem:[%s189 + $0x8] sm:$0x1]
      %v518 = vld [vmem:[%s189 + $0x18] sm:$0x1]
      %v519 = vld [vmem:[%s189 + $0x28] sm:$0x1]
      %v520 = vld [vmem:[%s189 + $0x38] sm:$0x1]
      %s521 = scalar_lea.vmem %s197, 128
      %v522 = vld [vmem:[%s521] sm:$0xff]
      %v523 = vld [vmem:[%s521 + $0x8] sm:$0xff]
      %v524 = vlaneseq
      %v525 = vshrl.u32 %v524, 7
      %v526 = vsub.s32 0, %v525
      %v527 = vrot.slane %v517, %v526
      %v528 = vlaneseq
      %v529 = vshrl.u32 %v528, 7
      %v530 = vsub.s32 0, %v529
      %v531 = vrot.slane %v518, %v530
      %v532 = vlaneseq
      %v533 = vshrl.u32 %v532, 7
      %v534 = vsub.s32 0, %v533
      %v535 = vrot.slane %v519, %v534
      %v536 = vlaneseq
      %v537 = vshrl.u32 %v536, 7
      %v538 = vsub.s32 0, %v537
      %v539 = vrot.slane %v520, %v538
      %v540 = vmul.f32 %v527, %v522
      %v541 = vmul.f32 %v527, %v523
      %v542 = vmul.f32 %v531, %v522
      %v543 = vmul.f32 %v531, %v523
      %v544 = vmul.f32 %v535, %v522
      %v545 = vmul.f32 %v535, %v523
      %v546 = vmul.f32 %v539, %v522
      %v547 = vmul.f32 %v539, %v523
      %v548 = vadd.f32 %v509, %v540
      %v549 = vadd.f32 %v510, %v541
      %v550 = vadd.f32 %v511, %v542
      %v551 = vadd.f32 %v512, %v543
      %v552 = vadd.f32 %v513, %v544
      %v553 = vadd.f32 %v514, %v545
      %v554 = vadd.f32 %v515, %v546
      %v555 = vadd.f32 %v516, %v547
      %v556 = vld [vmem:[%s189 + $0x9] sm:$0x1]
      %v557 = vld [vmem:[%s189 + $0x19] sm:$0x1]
      %v558 = vld [vmem:[%s189 + $0x29] sm:$0x1]
      %v559 = vld [vmem:[%s189 + $0x39] sm:$0x1]
      %s560 = scalar_lea.vmem %s197, 144
      %v561 = vld [vmem:[%s560] sm:$0xff]
      %v562 = vld [vmem:[%s560 + $0x8] sm:$0xff]
      %v563 = vlaneseq
      %v564 = vshrl.u32 %v563, 7
      %v565 = vsub.s32 0, %v564
      %v566 = vrot.slane %v556, %v565
      %v567 = vlaneseq
      %v568 = vshrl.u32 %v567, 7
      %v569 = vsub.s32 0, %v568
      %v570 = vrot.slane %v557, %v569
      %v571 = vlaneseq
      %v572 = vshrl.u32 %v571, 7
      %v573 = vsub.s32 0, %v572
      %v574 = vrot.slane %v558, %v573
      %v575 = vlaneseq
      %v576 = vshrl.u32 %v575, 7
      %v577 = vsub.s32 0, %v576
      %v578 = vrot.slane %v559, %v577
      %v579 = vmul.f32 %v566, %v561
      %v580 = vmul.f32 %v566, %v562
      %v581 = vmul.f32 %v570, %v561
      %v582 = vmul.f32 %v570, %v562
      %v583 = vmul.f32 %v574, %v561
      %v584 = vmul.f32 %v574, %v562
      %v585 = vmul.f32 %v578, %v561
      %v586 = vmul.f32 %v578, %v562
      %v587 = vadd.f32 %v548, %v579
      %v588 = vadd.f32 %v549, %v580
      %v589 = vadd.f32 %v550, %v581
      %v590 = vadd.f32 %v551, %v582
      %v591 = vadd.f32 %v552, %v583
      %v592 = vadd.f32 %v553, %v584
      %v593 = vadd.f32 %v554, %v585
      %v594 = vadd.f32 %v555, %v586
      %v595 = vld [vmem:[%s189 + $0xa] sm:$0x1]
      %v596 = vld [vmem:[%s189 + $0x1a] sm:$0x1]
      %v597 = vld [vmem:[%s189 + $0x2a] sm:$0x1]
      %v598 = vld [vmem:[%s189 + $0x3a] sm:$0x1]
      %s599 = scalar_lea.vmem %s197, 160
      %v600 = vld [vmem:[%s599] sm:$0xff]
      %v601 = vld [vmem:[%s599 + $0x8] sm:$0xff]
      %v602 = vlaneseq
      %v603 = vshrl.u32 %v602, 7
      %v604 = vsub.s32 0, %v603
      %v605 = vrot.slane %v595, %v604
      %v606 = vlaneseq
      %v607 = vshrl.u32 %v606, 7
      %v608 = vsub.s32 0, %v607
      %v609 = vrot.slane %v596, %v608
      %v610 = vlaneseq
      %v611 = vshrl.u32 %v610, 7
      %v612 = vsub.s32 0, %v611
      %v613 = vrot.slane %v597, %v612
      %v614 = vlaneseq
      %v615 = vshrl.u32 %v614, 7
      %v616 = vsub.s32 0, %v615
      %v617 = vrot.slane %v598, %v616
      %v618 = vmul.f32 %v605, %v600
      %v619 = vmul.f32 %v605, %v601
      %v620 = vmul.f32 %v609, %v600
      %v621 = vmul.f32 %v609, %v601
      %v622 = vmul.f32 %v613, %v600
      %v623 = vmul.f32 %v613, %v601
      %v624 = vmul.f32 %v617, %v600
      %v625 = vmul.f32 %v617, %v601
      %v626 = vadd.f32 %v587, %v618
      %v627 = vadd.f32 %v588, %v619
      %v628 = vadd.f32 %v589, %v620
      %v629 = vadd.f32 %v590, %v621
      %v630 = vadd.f32 %v591, %v622
      %v631 = vadd.f32 %v592, %v623
      %v632 = vadd.f32 %v593, %v624
      %v633 = vadd.f32 %v594, %v625
      %v634 = vld [vmem:[%s189 + $0xb] sm:$0x1]
      %v635 = vld [vmem:[%s189 + $0x1b] sm:$0x1]
      %v636 = vld [vmem:[%s189 + $0x2b] sm:$0x1]
      %v637 = vld [vmem:[%s189 + $0x3b] sm:$0x1]
      %s638 = scalar_lea.vmem %s197, 176
      %v639 = vld [vmem:[%s638] sm:$0xff]
      %v640 = vld [vmem:[%s638 + $0x8] sm:$0xff]
      %v641 = vlaneseq
      %v642 = vshrl.u32 %v641, 7
      %v643 = vsub.s32 0, %v642
      %v644 = vrot.slane %v634, %v643
      %v645 = vlaneseq
      %v646 = vshrl.u32 %v645, 7
      %v647 = vsub.s32 0, %v646
      %v648 = vrot.slane %v635, %v647
      %v649 = vlaneseq
      %v650 = vshrl.u32 %v649, 7
      %v651 = vsub.s32 0, %v650
      %v652 = vrot.slane %v636, %v651
      %v653 = vlaneseq
      %v654 = vshrl.u32 %v653, 7
      %v655 = vsub.s32 0, %v654
      %v656 = vrot.slane %v637, %v655
      %v657 = vmul.f32 %v644, %v639
      %v658 = vmul.f32 %v644, %v640
      %v659 = vmul.f32 %v648, %v639
      %v660 = vmul.f32 %v648, %v640
      %v661 = vmul.f32 %v652, %v639
      %v662 = vmul.f32 %v652, %v640
      %v663 = vmul.f32 %v656, %v639
      %v664 = vmul.f32 %v656, %v640
      %v665 = vadd.f32 %v626, %v657
      %v666 = vadd.f32 %v627, %v658
      %v667 = vadd.f32 %v628, %v659
      %v668 = vadd.f32 %v629, %v660
      %v669 = vadd.f32 %v630, %v661
      %v670 = vadd.f32 %v631, %v662
      %v671 = vadd.f32 %v632, %v663
      %v672 = vadd.f32 %v633, %v664
      %v673 = vld [vmem:[%s189 + $0xc] sm:$0x1]
      %v674 = vld [vmem:[%s189 + $0x1c] sm:$0x1]
      %v675 = vld [vmem:[%s189 + $0x2c] sm:$0x1]
      %v676 = vld [vmem:[%s189 + $0x3c] sm:$0x1]
      %s677 = scalar_lea.vmem %s197, 192
      %v678 = vld [vmem:[%s677] sm:$0xff]
      %v679 = vld [vmem:[%s677 + $0x8] sm:$0xff]
      %v680 = vlaneseq
      %v681 = vshrl.u32 %v680, 7
      %v682 = vsub.s32 0, %v681
      %v683 = vrot.slane %v673, %v682
      %v684 = vlaneseq
      %v685 = vshrl.u32 %v684, 7
      %v686 = vsub.s32 0, %v685
      %v687 = vrot.slane %v674, %v686
      %v688 = vlaneseq
      %v689 = vshrl.u32 %v688, 7
      %v690 = vsub.s32 0, %v689
      %v691 = vrot.slane %v675, %v690
      %v692 = vlaneseq
      %v693 = vshrl.u32 %v692, 7
      %v694 = vsub.s32 0, %v693
      %v695 = vrot.slane %v676, %v694
      %v696 = vmul.f32 %v683, %v678
      %v697 = vmul.f32 %v683, %v679
      %v698 = vmul.f32 %v687, %v678
      %v699 = vmul.f32 %v687, %v679
      %v700 = vmul.f32 %v691, %v678
      %v701 = vmul.f32 %v691, %v679
      %v702 = vmul.f32 %v695, %v678
      %v703 = vmul.f32 %v695, %v679
      %v704 = vadd.f32 %v665, %v696
      %v705 = vadd.f32 %v666, %v697
      %v706 = vadd.f32 %v667, %v698
      %v707 = vadd.f32 %v668, %v699
      %v708 = vadd.f32 %v669, %v700
      %v709 = vadd.f32 %v670, %v701
      %v710 = vadd.f32 %v671, %v702
      %v711 = vadd.f32 %v672, %v703
      %v712 = vld [vmem:[%s189 + $0xd] sm:$0x1]
      %v713 = vld [vmem:[%s189 + $0x1d] sm:$0x1]
      %v714 = vld [vmem:[%s189 + $0x2d] sm:$0x1]
      %v715 = vld [vmem:[%s189 + $0x3d] sm:$0x1]
      %s716 = scalar_lea.vmem %s197, 208
      %v717 = vld [vmem:[%s716] sm:$0xff]
      %v718 = vld [vmem:[%s716 + $0x8] sm:$0xff]
      %v719 = vlaneseq
      %v720 = vshrl.u32 %v719, 7
      %v721 = vsub.s32 0, %v720
      %v722 = vrot.slane %v712, %v721
      %v723 = vlaneseq
      %v724 = vshrl.u32 %v723, 7
      %v725 = vsub.s32 0, %v724
      %v726 = vrot.slane %v713, %v725
      %v727 = vlaneseq
      %v728 = vshrl.u32 %v727, 7
      %v729 = vsub.s32 0, %v728
      %v730 = vrot.slane %v714, %v729
      %v731 = vlaneseq
      %v732 = vshrl.u32 %v731, 7
      %v733 = vsub.s32 0, %v732
      %v734 = vrot.slane %v715, %v733
      %v735 = vmul.f32 %v722, %v717
      %v736 = vmul.f32 %v722, %v718
      %v737 = vmul.f32 %v726, %v717
      %v738 = vmul.f32 %v726, %v718
      %v739 = vmul.f32 %v730, %v717
      %v740 = vmul.f32 %v730, %v718
      %v741 = vmul.f32 %v734, %v717
      %v742 = vmul.f32 %v734, %v718
      %v743 = vadd.f32 %v704, %v735
      %v744 = vadd.f32 %v705, %v736
      %v745 = vadd.f32 %v706, %v737
      %v746 = vadd.f32 %v707, %v738
      %v747 = vadd.f32 %v708, %v739
      %v748 = vadd.f32 %v709, %v740
      %v749 = vadd.f32 %v710, %v741
      %v750 = vadd.f32 %v711, %v742
      %v751 = vld [vmem:[%s189 + $0xe] sm:$0x1]
      %v752 = vld [vmem:[%s189 + $0x1e] sm:$0x1]
      %v753 = vld [vmem:[%s189 + $0x2e] sm:$0x1]
      %v754 = vld [vmem:[%s189 + $0x3e] sm:$0x1]
      %s755 = scalar_lea.vmem %s197, 224
      %v756 = vld [vmem:[%s755] sm:$0xff]
      %v757 = vld [vmem:[%s755 + $0x8] sm:$0xff]
      %v758 = vlaneseq
      %v759 = vshrl.u32 %v758, 7
      %v760 = vsub.s32 0, %v759
      %v761 = vrot.slane %v751, %v760
      %v762 = vlaneseq
      %v763 = vshrl.u32 %v762, 7
      %v764 = vsub.s32 0, %v763
      %v765 = vrot.slane %v752, %v764
      %v766 = vlaneseq
      %v767 = vshrl.u32 %v766, 7
      %v768 = vsub.s32 0, %v767
      %v769 = vrot.slane %v753, %v768
      %v770 = vlaneseq
      %v771 = vshrl.u32 %v770, 7
      %v772 = vsub.s32 0, %v771
      %v773 = vrot.slane %v754, %v772
      %v774 = vmul.f32 %v761, %v756
      %v775 = vmul.f32 %v761, %v757
      %v776 = vmul.f32 %v765, %v756
      %v777 = vmul.f32 %v765, %v757
      %v778 = vmul.f32 %v769, %v756
      %v779 = vmul.f32 %v769, %v757
      %v780 = vmul.f32 %v773, %v756
      %v781 = vmul.f32 %v773, %v757
      %v782 = vadd.f32 %v743, %v774
      %v783 = vadd.f32 %v744, %v775
      %v784 = vadd.f32 %v745, %v776
      %v785 = vadd.f32 %v746, %v777
      %v786 = vadd.f32 %v747, %v778
      %v787 = vadd.f32 %v748, %v779
      %v788 = vadd.f32 %v749, %v780
      %v789 = vadd.f32 %v750, %v781
      %v790 = vld [vmem:[%s189 + $0xf] sm:$0x1]
      %v791 = vld [vmem:[%s189 + $0x1f] sm:$0x1]
      %v792 = vld [vmem:[%s189 + $0x2f] sm:$0x1]
      %v793 = vld [vmem:[%s189 + $0x3f] sm:$0x1]
      %s794 = scalar_lea.vmem %s197, 240
      %v795 = vld [vmem:[%s794] sm:$0xff]
      %v796 = vld [vmem:[%s794 + $0x8] sm:$0xff]
      %v797 = vlaneseq
      %v798 = vshrl.u32 %v797, 7
      %v799 = vsub.s32 0, %v798
      %v800 = vrot.slane %v790, %v799
      %v801 = vlaneseq
      %v802 = vshrl.u32 %v801, 7
      %v803 = vsub.s32 0, %v802
      %v804 = vrot.slane %v791, %v803
      %v805 = vlaneseq
      %v806 = vshrl.u32 %v805, 7
      %v807 = vsub.s32 0, %v806
      %v808 = vrot.slane %v792, %v807
      %v809 = vlaneseq
      %v810 = vshrl.u32 %v809, 7
      %v811 = vsub.s32 0, %v810
      %v812 = vrot.slane %v793, %v811
      %v813 = vmul.f32 %v800, %v795
      %v814 = vmul.f32 %v800, %v796
      %v815 = vmul.f32 %v804, %v795
      %v816 = vmul.f32 %v804, %v796
      %v817 = vmul.f32 %v808, %v795
      %v818 = vmul.f32 %v808, %v796
      %v819 = vmul.f32 %v812, %v795
      %v820 = vmul.f32 %v812, %v796
      %v821 = vadd.f32 %v782, %v813
      %v822 = vadd.f32 %v783, %v814
      %v823 = vadd.f32 %v784, %v815
      %v824 = vadd.f32 %v785, %v816
      %v825 = vadd.f32 %v786, %v817
      %v826 = vadd.f32 %v787, %v818
      %v827 = vadd.f32 %v788, %v819
      %v828 = vadd.f32 %v789, %v820
      %vm829 = vcmask 64512
      %830 = vst.msk [vmem:[%s205] sm:$0xff] %vm829, %v821
      %831 = vst.msk [vmem:[%s205 + $0x8] sm:$0xff] %vm829, %v822
      %832 = vst.msk [vmem:[%s205 + $0x10] sm:$0xff] %vm829, %v823
      %833 = vst.msk [vmem:[%s205 + $0x18] sm:$0xff] %vm829, %v824
      %834 = vst.msk [vmem:[%s205 + $0x20] sm:$0xff] %vm829, %v825
      %835 = vst.msk [vmem:[%s205 + $0x28] sm:$0xff] %vm829, %v826
      %836 = vst.msk [vmem:[%s205 + $0x30] sm:$0xff] %vm829, %v827
      %837 = vst.msk [vmem:[%s205 + $0x38] sm:$0xff] %vm829, %v828
      %p838 = scmp.lt.s32.totalorder %s17, 1
      %s839 = scalar_select %p838, %s17, 1
      %p840 = scmp.lt.s32.totalorder %s18, 0
      %s841 = scalar_select %p840, %s18, 0
      %s842 = smul.addr %s839, 8
      %s843 = sadd.s32 %s841, %s842
      %s844 = smul.addr %s843, 8
      %s845 = scalar_lea.vmem %s2, %s844
      // Predicated region
      $region29: #{tpu_custom_call.1} parent=27 // pred_check
        %p846 = pneg %p101
      $region30: #{tpu_custom_call.1} parent=27 // pred_check_branch
        %848 = sbr.rel (%p846) target = $region32
      $region31: #{tpu_custom_call.1} parent=27 // pred_region
        _
      $region32: #{tpu_custom_call.1} parent=27 // pred_fallthru
        _
    $region28: #{tpu_custom_call.1} parent=5 // pred_fallthru
      _
    %p849 = scmp.le.s32.totalorder 2, %s8
    // Predicated region
    $region33: #{tpu_custom_call.1} parent=5 // pred_check
      %p850 = pneg %p849
    $region34: #{tpu_custom_call.1} parent=5 // pred_check_branch
      %852 = sbr.rel (%p850) target = $region36
    $region35: #{tpu_custom_call.1} parent=5 // pred_region
      %s853 = ssub.s32 %s8, 2
      // Predicated region
      $region37: #{tpu_custom_call.1} parent=35 // pred_check
        %p854 = pneg %p107
      $region38: #{tpu_custom_call.1} parent=35 // pred_check_branch
        %856 = sbr.rel (%p854) target = $region40
      $region39: #{tpu_custom_call.1} parent=35 // pred_region
        %p857 = scmp.lt.s32.totalorder %s19, 1
        %s858 = scalar_select %p857, %s19, 1
        %p859 = scmp.lt.s32.totalorder %s20, 0
        %s860 = scalar_select %p859, %s20, 0
        %s861 = smul.addr %s858, 8
        %s862 = sadd.s32 %s860, %s861
        %s863 = smul.addr %s862, 8
        %s864 = scalar_lea.vmem %s2, %s863
      $region40: #{tpu_custom_call.1} parent=35 // pred_fallthru
        _
    $region36: #{tpu_custom_call.1} parent=5 // pred_fallthru
      _
  $region6: #{tpu_custom_call.1} parent=0 // loop_footer
    %s12 = sadd.s32 1, %s8
  $region7: #{tpu_custom_call.1} parent=0 // loop_footer_branch
    %7 = sbr.rel target = $region3
  $region8: #{tpu_custom_call.1} parent=0 // loop_exit
    _

</llo_original>
